<compile_context>
chip_gen: v5e
topology: v5e:2x2
jax: 0.10.0
libtpu: 0.0.40
codegen_flags: <defaults>
</compile_context>

<pallas_src>
import functools

import jax
import jax.numpy as jnp
from jax.experimental import pallas as pl
from jax.experimental.pallas import tpu as pltpu


def vae_kernel(x_ref, eps_ref,
               w1_ref, b1_ref, w2_ref, b2_ref, w3_ref, b3_ref,
               w4_ref, b4_ref, w5_ref, b5_ref, w6_ref, b6_ref,
               out_ref):
    f32 = jnp.float32
    mm_dtype = w1_ref.dtype          # matmul operand dtype (bf16 by default)
    L = eps_ref.shape[1]

    # Cast x to the matmul dtype in-kernel (VPU, hidden under the pipeline) so the
    # wrapper does not materialize a bf16 copy of x in HBM.
    x = x_ref[...].astype(mm_dtype)

    # ---- encoder: Linear(in,128) -> ReLU -> Linear(128,64) -> ReLU -> Linear(64, 2L)
    h1 = jnp.dot(x, w1_ref[...], preferred_element_type=f32) + b1_ref[...]
    h1 = jnp.maximum(h1, 0.0).astype(mm_dtype)
    h2 = jnp.dot(h1, w2_ref[...], preferred_element_type=f32) + b2_ref[...]
    h2 = jnp.maximum(h2, 0.0).astype(mm_dtype)
    enc = jnp.dot(h2, w3_ref[...], preferred_element_type=f32) + b3_ref[...]

    # ---- reparameterize: z = mu + eps * exp(0.5 * logvar)   (torch.chunk == slice)
    mu = enc[:, :L]
    logvar = enc[:, L:]
    std = jnp.exp(0.5 * logvar)
    z = (mu + eps_ref[...] * std).astype(mm_dtype)

    # ---- decoder: Linear(L,64) -> ReLU -> Linear(64,128) -> ReLU -> Linear(128,in) -> Sigmoid
    d1 = jnp.dot(z, w4_ref[...], preferred_element_type=f32) + b4_ref[...]
    d1 = jnp.maximum(d1, 0.0).astype(mm_dtype)
    d2 = jnp.dot(d1, w5_ref[...], preferred_element_type=f32) + b5_ref[...]
    d2 = jnp.maximum(d2, 0.0).astype(mm_dtype)
    logits = jnp.dot(d2, w6_ref[...], preferred_element_type=f32) + b6_ref[...]
    recon = jax.nn.sigmoid(logits)

    # Single fused lane-dense store: [recon | mu | logvar] -> one output DMA per step.
    out_ref[...] = jnp.concatenate([recon, enc], axis=1).astype(out_ref.dtype)


def _round_up(n, m):
    return ((n + m - 1) // m) * m


def _resident_spec(shape):
    # Constant block index -> DMA'd once, stays resident in VMEM across the grid.
    return pl.BlockSpec(shape, lambda i, _n=len(shape): (0,) * _n)


@functools.partial(jax.jit, static_argnames=("block_b", "matmul_dtype"))
def vae_forward(x, eps, params, *, block_b=1024, matmul_dtype=jnp.bfloat16):
    (w1, b1, w2, b2, w3, b3, w4, b4, w5, b5, w6, b6) = params
    B, input_dim = x.shape
    L = eps.shape[1]
    D_out = input_dim + 2 * L

    # Weights in bf16 (MXU-native operands, tiny one-time cast); biases f32.
    ws = [w.astype(matmul_dtype) for w in (w1, w2, w3, w4, w5, w6)]
    bs = [b.astype(jnp.float32) for b in (b1, b2, b3, b4, b5, b6)]

    # ---- batch tile selection ------------------------------------------------
    # Cap is forced to a multiple of 16 (bf16 sublane pack) so an odd block_b can
    # never produce an illegal second-minor block dim.
    tb_cap = max(16, (int(block_b) // 16) * 16)
    if B <= tb_cap:
        if B >= 512:
            # Large single-tile batch: split into 2 tiles so "parallel" can shard
            # the grid across v7x's 2 TensorCores (no-op on v5e/v6e).
            TB = _round_up((B + 1) // 2, 16)
        else:
            TB = B                      # one full-batch tile (block dim == array dim)
    else:
        TB = tb_cap                     # multiple of 16; ragged last tile is masked
    grid = (pl.cdiv(B, TB),)

    wb_inputs = []
    wb_specs = []
    for w, b in zip(ws, bs):
        wb_inputs += [w, b]
        wb_specs += [_resident_spec(w.shape), _resident_spec(b.shape)]

    in_specs = [
        pl.BlockSpec((TB, input_dim), lambda i: (i, 0)),   # x: streamed f32 per step
        pl.BlockSpec((TB, L), lambda i: (i, 0)),           # eps: streamed f32 per step
    ] + wb_specs

    out_shape = jax.ShapeDtypeStruct((B, D_out), jnp.float32)   # [recon | mu | logvar]
    out_specs = pl.BlockSpec((TB, D_out), lambda i: (i, 0))

    # ---- VMEM budget: generous (2x double-buffering, bf16 temps), never tight ----
    mm_bytes = jnp.dtype(matmul_dtype).itemsize
    w_bytes = 2 * (sum(w.size for w in ws) * mm_bytes + sum(b.size for b in bs) * 4)
    stream_bytes = 2 * TB * ((input_dim + L) * 4 + D_out * 4)
    per_row = (128 + 64 + 2 * L + 64 + 128 + input_dim + D_out) * (4 + mm_bytes)
    vmem_limit = int(w_bytes + stream_bytes + TB * per_row) + (8 << 20)
    vmem_limit = min(64 << 20, max(vmem_limit, 32 << 20))

    fused = pl.pallas_call(
        vae_kernel,
        grid=grid,
        out_shape=out_shape,
        in_specs=in_specs,
        out_specs=out_specs,
        compiler_params=pltpu.CompilerParams(
            dimension_semantics=("parallel",),   # megacore sharding on v7x
            vmem_limit_bytes=vmem_limit,
        ),
    )(x, eps, *wb_inputs)

    recon = fused[:, :input_dim]
    mu = fused[:, input_dim:input_dim + L]
    logvar = fused[:, input_dim + L:]
    return recon, mu, logvar


def init_params(key, input_dim, latent_dim):
    """Deterministic synthetic params; weights stored [in, out]."""
    dims = [
        (input_dim, 128), (128, 64), (64, latent_dim * 2),      # encoder
        (latent_dim, 64), (64, 128), (128, input_dim),          # decoder
    ]
    params = []
    for i, (din, dout) in enumerate(dims):
        kw, kb = jax.random.split(jax.random.fold_in(key, i))
        scale = 1.0 / jnp.sqrt(jnp.float32(din))
        w = jax.random.uniform(kw, (din, dout), jnp.float32, -scale, scale)
        b = jax.random.uniform(kb, (1, dout), jnp.float32, -scale, scale)
        params.extend([w, b])
    return tuple(params)


def vae_forward_ref(x, eps, params, matmul_dtype=jnp.bfloat16):
    """Pure-JAX reference with the same bf16-operand / f32-accumulate math."""
    (w1, b1, w2, b2, w3, b3, w4, b4, w5, b5, w6, b6) = params
    L = eps.shape[1]
    f32 = jnp.float32

    def mm(a, w, b):
        return jnp.dot(a.astype(matmul_dtype), w.astype(matmul_dtype),
                       preferred_element_type=f32) + b.astype(f32)

    h = jnp.maximum(mm(x, w1, b1), 0.0)
    h = jnp.maximum(mm(h, w2, b2), 0.0)
    enc = mm(h, w3, b3)
    mu, logvar = enc[:, :L], enc[:, L:]
    z = mu + eps * jnp.exp(0.5 * logvar)
    d = jnp.maximum(mm(z, w4, b4), 0.0)
    d = jnp.maximum(mm(d, w5, b5), 0.0)
    recon = jax.nn.sigmoid(mm(d, w6, b6))
    return recon, mu, logvar


if __name__ == "__main__":
    input_dim = 32
    latent_dim = 8
    batch = 8

    key = jax.random.PRNGKey(0)
    kx, keps, kp = jax.random.split(key, 3)

    x = jax.random.normal(kx, (batch, input_dim), jnp.float32)
    eps = jax.random.normal(keps, (batch, latent_dim), jnp.float32)
    params = init_params(kp, input_dim, latent_dim)

    recon, mu, logvar = vae_forward(x, eps, params)
    jax.block_until_ready((recon, mu, logvar))

    r_ref, m_ref, lv_ref = vae_forward_ref(x, eps, params)
    assert recon.shape == (batch, input_dim)
    assert mu.shape == (batch, latent_dim) and logvar.shape == (batch, latent_dim)
    assert jnp.allclose(recon, r_ref, atol=2e-3, rtol=2e-3)
    assert jnp.allclose(mu, m_ref, atol=2e-3, rtol=2e-3)
    assert jnp.allclose(logvar, lv_ref, atol=2e-3, rtol=2e-3)

    # Ragged multi-step grid: B not a multiple of TB; masked last tile, no jnp.pad.
    batch2 = 20
    x2 = jax.random.normal(jax.random.fold_in(key, 7), (batch2, input_dim), jnp.float32)
    eps2 = jax.random.normal(jax.random.fold_in(key, 8), (batch2, latent_dim), jnp.float32)
    r2, m2, lv2 = vae_forward(x2, eps2, params, block_b=16)
    jax.block_until_ready((r2, m2, lv2))
    r2_ref, m2_ref, lv2_ref = vae_forward_ref(x2, eps2, params)
    assert r2.shape == (batch2, input_dim)
    assert jnp.allclose(r2, r2_ref, atol=2e-3, rtol=2e-3)
    assert jnp.allclose(m2, m2_ref, atol=2e-3, rtol=2e-3)
    assert jnp.allclose(lv2, lv2_ref, atol=2e-3, rtol=2e-3)

    # Larger batch exercising the two-tile split (even grid for v7x megacore) with a
    # ragged second tile.
    batch3 = 600
    x3 = jax.random.normal(jax.random.fold_in(key, 9), (batch3, input_dim), jnp.float32)
    eps3 = jax.random.normal(jax.random.fold_in(key, 10), (batch3, latent_dim), jnp.float32)
    r3, m3, lv3 = vae_forward(x3, eps3, params)
    jax.block_until_ready((r3, m3, lv3))
    r3_ref, m3_ref, lv3_ref = vae_forward_ref(x3, eps3, params)
    assert r3.shape == (batch3, input_dim)
    assert jnp.allclose(r3, r3_ref, atol=2e-3, rtol=2e-3)
    assert jnp.allclose(m3, m3_ref, atol=2e-3, rtol=2e-3)
    assert jnp.allclose(lv3, lv3_ref, atol=2e-3, rtol=2e-3)

    print("KERNEL_OK")
</pallas_src>

<mosaic_0001>
module attributes {stable_mosaic.version = 11 : i64} {
  func.func @vae_kernel(%arg0: i32, %arg1: memref<8x32xf32, #tpu.memory_space<vmem>>, %arg2: memref<8x8xf32, #tpu.memory_space<vmem>>, %arg3: memref<32x128xbf16, #tpu.memory_space<vmem>>, %arg4: memref<1x128xf32, #tpu.memory_space<vmem>>, %arg5: memref<128x64xbf16, #tpu.memory_space<vmem>>, %arg6: memref<1x64xf32, #tpu.memory_space<vmem>>, %arg7: memref<64x16xbf16, #tpu.memory_space<vmem>>, %arg8: memref<1x16xf32, #tpu.memory_space<vmem>>, %arg9: memref<8x64xbf16, #tpu.memory_space<vmem>>, %arg10: memref<1x64xf32, #tpu.memory_space<vmem>>, %arg11: memref<64x128xbf16, #tpu.memory_space<vmem>>, %arg12: memref<1x128xf32, #tpu.memory_space<vmem>>, %arg13: memref<128x32xbf16, #tpu.memory_space<vmem>>, %arg14: memref<1x32xf32, #tpu.memory_space<vmem>>, %arg15: memref<8x48xf32, #tpu.memory_space<vmem>>) attributes {dimension_semantics = [#tpu.dimension_semantics<parallel>], iteration_bounds = array<i64: 1>, scalar_prefetch = 0 : i64, scratch_operands = 0 : i64, tpu.core_type = #tpu.core_type<tc>, window_params = [{transform_indices = @transform_0, window_bounds = array<i64: 8, 32>}, {transform_indices = @transform_1, window_bounds = array<i64: 8, 8>}, {pipeline_mode = #tpu.pipeline_mode<synchronous>, transform_indices = @transform_2, window_bounds = array<i64: 32, 128>}, {pipeline_mode = #tpu.pipeline_mode<synchronous>, transform_indices = @transform_3, window_bounds = array<i64: 1, 128>}, {pipeline_mode = #tpu.pipeline_mode<synchronous>, transform_indices = @transform_4, window_bounds = array<i64: 128, 64>}, {pipeline_mode = #tpu.pipeline_mode<synchronous>, transform_indices = @transform_5, window_bounds = array<i64: 1, 64>}, {pipeline_mode = #tpu.pipeline_mode<synchronous>, transform_indices = @transform_6, window_bounds = array<i64: 64, 16>}, {pipeline_mode = #tpu.pipeline_mode<synchronous>, transform_indices = @transform_7, window_bounds = array<i64: 1, 16>}, {pipeline_mode = #tpu.pipeline_mode<synchronous>, transform_indices = @transform_8, window_bounds = array<i64: 8, 64>}, {pipeline_mode = #tpu.pipeline_mode<synchronous>, transform_indices = @transform_9, window_bounds = array<i64: 1, 64>}, {pipeline_mode = #tpu.pipeline_mode<synchronous>, transform_indices = @transform_10, window_bounds = array<i64: 64, 128>}, {pipeline_mode = #tpu.pipeline_mode<synchronous>, transform_indices = @transform_11, window_bounds = array<i64: 1, 128>}, {pipeline_mode = #tpu.pipeline_mode<synchronous>, transform_indices = @transform_12, window_bounds = array<i64: 128, 32>}, {pipeline_mode = #tpu.pipeline_mode<synchronous>, transform_indices = @transform_13, window_bounds = array<i64: 1, 32>}, {transform_indices = @transform_14, window_bounds = array<i64: 8, 48>}]} {
    %c0 = arith.constant 0 : index
    %c0_0 = arith.constant 0 : index
    %0 = vector.load %arg1[%c0, %c0_0] : memref<8x32xf32, #tpu.memory_space<vmem>>, vector<8x32xf32>
    %1 = arith.truncf %0 : vector<8x32xf32> to vector<8x32xbf16>
    %c0_1 = arith.constant 0 : index
    %c0_2 = arith.constant 0 : index
    %2 = vector.load %arg3[%c0_1, %c0_2] : memref<32x128xbf16, #tpu.memory_space<vmem>>, vector<32x128xbf16>
    %cst = arith.constant dense<0.000000e+00> : vector<8x128xf32>
    %3 = tpu.matmul %1, %2, %cst {dimension_numbers = #tpu.dot_dimension_numbers<[1], [0], [0], [1], [0, 0, 1, 1], [], []>} : vector<8x32xbf16>, vector<32x128xbf16>, vector<8x128xf32> -> vector<8x128xf32>
    %c0_3 = arith.constant 0 : index
    %c0_4 = arith.constant 0 : index
    %4 = vector.load %arg4[%c0_3, %c0_4] : memref<1x128xf32, #tpu.memory_space<vmem>>, vector<1x128xf32>
    %5 = vector.broadcast %4 : vector<1x128xf32> to vector<8x128xf32>
    %6 = arith.addf %3, %5 : vector<8x128xf32>
    %cst_5 = arith.constant 0.000000e+00 : f32
    %7 = vector.broadcast %cst_5 : f32 to vector<8x128xf32>
    %8 = arith.maximumf %6, %7 : vector<8x128xf32>
    %9 = arith.truncf %8 : vector<8x128xf32> to vector<8x128xbf16>
    %c0_6 = arith.constant 0 : index
    %c0_7 = arith.constant 0 : index
    %10 = vector.load %arg5[%c0_6, %c0_7] : memref<128x64xbf16, #tpu.memory_space<vmem>>, vector<128x64xbf16>
    %cst_8 = arith.constant dense<0.000000e+00> : vector<8x64xf32>
    %11 = tpu.matmul %9, %10, %cst_8 {dimension_numbers = #tpu.dot_dimension_numbers<[1], [0], [0], [1], [0, 0, 1, 1], [], []>} : vector<8x128xbf16>, vector<128x64xbf16>, vector<8x64xf32> -> vector<8x64xf32>
    %c0_9 = arith.constant 0 : index
    %c0_10 = arith.constant 0 : index
    %12 = vector.load %arg6[%c0_9, %c0_10] : memref<1x64xf32, #tpu.memory_space<vmem>>, vector<1x64xf32>
    %13 = vector.broadcast %12 : vector<1x64xf32> to vector<8x64xf32>
    %14 = arith.addf %11, %13 : vector<8x64xf32>
    %cst_11 = arith.constant 0.000000e+00 : f32
    %15 = vector.broadcast %cst_11 : f32 to vector<8x64xf32>
    %16 = arith.maximumf %14, %15 : vector<8x64xf32>
    %17 = arith.truncf %16 : vector<8x64xf32> to vector<8x64xbf16>
    %c0_12 = arith.constant 0 : index
    %c0_13 = arith.constant 0 : index
    %18 = vector.load %arg7[%c0_12, %c0_13] : memref<64x16xbf16, #tpu.memory_space<vmem>>, vector<64x16xbf16>
    %cst_14 = arith.constant dense<0.000000e+00> : vector<8x16xf32>
    %19 = tpu.matmul %17, %18, %cst_14 {dimension_numbers = #tpu.dot_dimension_numbers<[1], [0], [0], [1], [0, 0, 1, 1], [], []>} : vector<8x64xbf16>, vector<64x16xbf16>, vector<8x16xf32> -> vector<8x16xf32>
    %c0_15 = arith.constant 0 : index
    %c0_16 = arith.constant 0 : index
    %20 = vector.load %arg8[%c0_15, %c0_16] : memref<1x16xf32, #tpu.memory_space<vmem>>, vector<1x16xf32>
    %21 = vector.broadcast %20 : vector<1x16xf32> to vector<8x16xf32>
    %22 = arith.addf %19, %21 : vector<8x16xf32>
    %23 = vector.extract_strided_slice %22 {offsets = [0, 0], sizes = [8, 8], strides = [1, 1]} : vector<8x16xf32> to vector<8x8xf32>
    %24 = vector.extract_strided_slice %22 {offsets = [0, 8], sizes = [8, 8], strides = [1, 1]} : vector<8x16xf32> to vector<8x8xf32>
    %cst_17 = arith.constant 5.000000e-01 : f32
    %25 = vector.broadcast %cst_17 : f32 to vector<8x8xf32>
    %26 = arith.mulf %25, %24 : vector<8x8xf32>
    %27 = math.exp %26 : vector<8x8xf32>
    %c0_18 = arith.constant 0 : index
    %c0_19 = arith.constant 0 : index
    %28 = vector.load %arg2[%c0_18, %c0_19] : memref<8x8xf32, #tpu.memory_space<vmem>>, vector<8x8xf32>
    %29 = arith.mulf %28, %27 : vector<8x8xf32>
    %30 = arith.addf %23, %29 : vector<8x8xf32>
    %31 = arith.truncf %30 : vector<8x8xf32> to vector<8x8xbf16>
    %c0_20 = arith.constant 0 : index
    %c0_21 = arith.constant 0 : index
    %32 = vector.load %arg9[%c0_20, %c0_21] : memref<8x64xbf16, #tpu.memory_space<vmem>>, vector<8x64xbf16>
    %cst_22 = arith.constant dense<0.000000e+00> : vector<8x64xf32>
    %33 = tpu.matmul %31, %32, %cst_22 {dimension_numbers = #tpu.dot_dimension_numbers<[1], [0], [0], [1], [0, 0, 1, 1], [], []>} : vector<8x8xbf16>, vector<8x64xbf16>, vector<8x64xf32> -> vector<8x64xf32>
    %c0_23 = arith.constant 0 : index
    %c0_24 = arith.constant 0 : index
    %34 = vector.load %arg10[%c0_23, %c0_24] : memref<1x64xf32, #tpu.memory_space<vmem>>, vector<1x64xf32>
    %35 = vector.broadcast %34 : vector<1x64xf32> to vector<8x64xf32>
    %36 = arith.addf %33, %35 : vector<8x64xf32>
    %cst_25 = arith.constant 0.000000e+00 : f32
    %37 = vector.broadcast %cst_25 : f32 to vector<8x64xf32>
    %38 = arith.maximumf %36, %37 : vector<8x64xf32>
    %39 = arith.truncf %38 : vector<8x64xf32> to vector<8x64xbf16>
    %c0_26 = arith.constant 0 : index
    %c0_27 = arith.constant 0 : index
    %40 = vector.load %arg11[%c0_26, %c0_27] : memref<64x128xbf16, #tpu.memory_space<vmem>>, vector<64x128xbf16>
    %cst_28 = arith.constant dense<0.000000e+00> : vector<8x128xf32>
    %41 = tpu.matmul %39, %40, %cst_28 {dimension_numbers = #tpu.dot_dimension_numbers<[1], [0], [0], [1], [0, 0, 1, 1], [], []>} : vector<8x64xbf16>, vector<64x128xbf16>, vector<8x128xf32> -> vector<8x128xf32>
    %c0_29 = arith.constant 0 : index
    %c0_30 = arith.constant 0 : index
    %42 = vector.load %arg12[%c0_29, %c0_30] : memref<1x128xf32, #tpu.memory_space<vmem>>, vector<1x128xf32>
    %43 = vector.broadcast %42 : vector<1x128xf32> to vector<8x128xf32>
    %44 = arith.addf %41, %43 : vector<8x128xf32>
    %cst_31 = arith.constant 0.000000e+00 : f32
    %45 = vector.broadcast %cst_31 : f32 to vector<8x128xf32>
    %46 = arith.maximumf %44, %45 : vector<8x128xf32>
    %47 = arith.truncf %46 : vector<8x128xf32> to vector<8x128xbf16>
    %c0_32 = arith.constant 0 : index
    %c0_33 = arith.constant 0 : index
    %48 = vector.load %arg13[%c0_32, %c0_33] : memref<128x32xbf16, #tpu.memory_space<vmem>>, vector<128x32xbf16>
    %cst_34 = arith.constant dense<0.000000e+00> : vector<8x32xf32>
    %49 = tpu.matmul %47, %48, %cst_34 {dimension_numbers = #tpu.dot_dimension_numbers<[1], [0], [0], [1], [0, 0, 1, 1], [], []>} : vector<8x128xbf16>, vector<128x32xbf16>, vector<8x32xf32> -> vector<8x32xf32>
    %c0_35 = arith.constant 0 : index
    %c0_36 = arith.constant 0 : index
    %50 = vector.load %arg14[%c0_35, %c0_36] : memref<1x32xf32, #tpu.memory_space<vmem>>, vector<1x32xf32>
    %51 = vector.broadcast %50 : vector<1x32xf32> to vector<8x32xf32>
    %52 = arith.addf %49, %51 : vector<8x32xf32>
    %53 = arith.negf %52 : vector<8x32xf32>
    %54 = math.exp %53 : vector<8x32xf32>
    %cst_37 = arith.constant 1.000000e+00 : f32
    %55 = vector.broadcast %cst_37 : f32 to vector<8x32xf32>
    %56 = arith.addf %55, %54 : vector<8x32xf32>
    %57 = arith.divf %55, %56 : vector<8x32xf32>
    %58 = tpu.concatenate %57, %22 in 1 : vector<8x32xf32>, vector<8x16xf32> -> vector<8x48xf32>
    %c0_38 = arith.constant 0 : index
    %c0_39 = arith.constant 0 : index
    %59 = vector.load %arg15[%c0_38, %c0_39] : memref<8x48xf32, #tpu.memory_space<vmem>>, vector<8x48xf32>
    tpu.vector_store %arg15[%c0_38, %c0_39], %58 {strides = array<i32>} : memref<8x48xf32, #tpu.memory_space<vmem>>, vector<8x48xf32>,
    return
  }
  func.func @transform_0(%arg0: i32) -> (i32, i32) {
    %c0_i32 = arith.constant 0 : i32
    %c0_i32_0 = arith.constant 0 : i32
    return %arg0, %c0_i32 : i32, i32
  }
  func.func @transform_1(%arg0: i32) -> (i32, i32) {
    %c0_i32 = arith.constant 0 : i32
    %c0_i32_0 = arith.constant 0 : i32
    return %arg0, %c0_i32 : i32, i32
  }
  func.func @transform_2(%arg0: i32) -> (i32, i32) {
    %c0_i32 = arith.constant 0 : i32
    %c0_i32_0 = arith.constant 0 : i32
    %c0_i32_1 = arith.constant 0 : i32
    return %c0_i32, %c0_i32_0 : i32, i32
  }
  func.func @transform_3(%arg0: i32) -> (i32, i32) {
    %c0_i32 = arith.constant 0 : i32
    %c0_i32_0 = arith.constant 0 : i32
    %c0_i32_1 = arith.constant 0 : i32
    return %c0_i32, %c0_i32_0 : i32, i32
  }
  func.func @transform_4(%arg0: i32) -> (i32, i32) {
    %c0_i32 = arith.constant 0 : i32
    %c0_i32_0 = arith.constant 0 : i32
    %c0_i32_1 = arith.constant 0 : i32
    return %c0_i32, %c0_i32_0 : i32, i32
  }
  func.func @transform_5(%arg0: i32) -> (i32, i32) {
    %c0_i32 = arith.constant 0 : i32
    %c0_i32_0 = arith.constant 0 : i32
    %c0_i32_1 = arith.constant 0 : i32
    return %c0_i32, %c0_i32_0 : i32, i32
  }
  func.func @transform_6(%arg0: i32) -> (i32, i32) {
    %c0_i32 = arith.constant 0 : i32
    %c0_i32_0 = arith.constant 0 : i32
    %c0_i32_1 = arith.constant 0 : i32
    return %c0_i32, %c0_i32_0 : i32, i32
  }
  func.func @transform_7(%arg0: i32) -> (i32, i32) {
    %c0_i32 = arith.constant 0 : i32
    %c0_i32_0 = arith.constant 0 : i32
    %c0_i32_1 = arith.constant 0 : i32
    return %c0_i32, %c0_i32_0 : i32, i32
  }
  func.func @transform_8(%arg0: i32) -> (i32, i32) {
    %c0_i32 = arith.constant 0 : i32
    %c0_i32_0 = arith.constant 0 : i32
    %c0_i32_1 = arith.constant 0 : i32
    return %c0_i32, %c0_i32_0 : i32, i32
  }
  func.func @transform_9(%arg0: i32) -> (i32, i32) {
    %c0_i32 = arith.constant 0 : i32
    %c0_i32_0 = arith.constant 0 : i32
    %c0_i32_1 = arith.constant 0 : i32
    return %c0_i32, %c0_i32_0 : i32, i32
  }
  func.func @transform_10(%arg0: i32) -> (i32, i32) {
    %c0_i32 = arith.constant 0 : i32
    %c0_i32_0 = arith.constant 0 : i32
    %c0_i32_1 = arith.constant 0 : i32
    return %c0_i32, %c0_i32_0 : i32, i32
  }
  func.func @transform_11(%arg0: i32) -> (i32, i32) {
    %c0_i32 = arith.constant 0 : i32
    %c0_i32_0 = arith.constant 0 : i32
    %c0_i32_1 = arith.constant 0 : i32
    return %c0_i32, %c0_i32_0 : i32, i32
  }
  func.func @transform_12(%arg0: i32) -> (i32, i32) {
    %c0_i32 = arith.constant 0 : i32
    %c0_i32_0 = arith.constant 0 : i32
    %c0_i32_1 = arith.constant 0 : i32
    return %c0_i32, %c0_i32_0 : i32, i32
  }
  func.func @transform_13(%arg0: i32) -> (i32, i32) {
    %c0_i32 = arith.constant 0 : i32
    %c0_i32_0 = arith.constant 0 : i32
    %c0_i32_1 = arith.constant 0 : i32
    return %c0_i32, %c0_i32_0 : i32, i32
  }
  func.func @transform_14(%arg0: i32) -> (i32, i32) {
    %c0_i32 = arith.constant 0 : i32
    %c0_i32_0 = arith.constant 0 : i32
    return %arg0, %c0_i32 : i32, i32
  }
}

</mosaic_0001>

<llo_original>
// kernel: vae_forward.1
$region0: #{vae_forward.1}
  #allocation0 [shape = 'u32[]', space=smem, size = 0x4, offset = 0x4, fixed_abs, tag = 'smem constant byte address 0x4 - core index']
  #allocation1 [shape = 'u32[72,128]{1,0:T(1,128)}', space=vmem, size = 0x9000, scoped, tag = 'internal scratch']
  %s0 = inlined_call_operand.vmem [shape: f32[8,32], index: 0, kind: input, shape index: {}]
  %s1 = inlined_call_operand.vmem [shape: f32[8,8], index: 1, kind: input, shape index: {}]
  %s2 = inlined_call_operand.vmem [shape: bf16[32,128], index: 2, kind: input, shape index: {}]
  %s3 = inlined_call_operand.vmem [shape: f32[1,128], index: 3, kind: input, shape index: {}]
  %s4 = inlined_call_operand.vmem [shape: bf16[128,64], index: 4, kind: input, shape index: {}]
  %s5 = inlined_call_operand.vmem [shape: f32[1,64], index: 5, kind: input, shape index: {}]
  %s6 = inlined_call_operand.vmem [shape: bf16[64,16], index: 6, kind: input, shape index: {}]
  %s7 = inlined_call_operand.vmem [shape: f32[1,16], index: 7, kind: input, shape index: {}]
  %s8 = inlined_call_operand.vmem [shape: bf16[8,64], index: 8, kind: input, shape index: {}]
  %s9 = inlined_call_operand.vmem [shape: f32[1,64], index: 9, kind: input, shape index: {}]
  %s10 = inlined_call_operand.vmem [shape: bf16[64,128], index: 10, kind: input, shape index: {}]
  %s11 = inlined_call_operand.vmem [shape: f32[1,128], index: 11, kind: input, shape index: {}]
  %s12 = inlined_call_operand.vmem [shape: bf16[128,32], index: 12, kind: input, shape index: {}]
  %s13 = inlined_call_operand.vmem [shape: f32[1,32], index: 13, kind: input, shape index: {}]
  %s14 = inlined_call_operand.vmem [shape: f32[8,48], index: 14, kind: output, shape index: {}]
  %s15 = sld [smem:[#allocation0]]
  $region66: #{vae_forward.1} parent=0
    _
  %s17 = ssub.s32 1, %s15
  %s18 = scalar_select 0, %s17, %s15
  // Predicated region
  $region2: #{vae_forward.1} parent=0 // pred_check
    _
  $region3: #{vae_forward.1} parent=0 // pred_check_branch
    %20 = sbr.rel (0) target = $region5
  $region4: #{vae_forward.1} parent=0 // pred_region
    _
  $region5: #{vae_forward.1} parent=0 // pred_fallthru
    _
  // Predicated region
  $region6: #{vae_forward.1} parent=0 // pred_check
    _
  $region7: #{vae_forward.1} parent=0 // pred_check_branch
    %22 = sbr.rel (0) target = $region9
  $region8: #{vae_forward.1} parent=0 // pred_region
    _
  $region9: #{vae_forward.1} parent=0 // pred_fallthru
    _
  // Predicated region
  $region10: #{vae_forward.1} parent=0 // pred_check
    _
  $region11: #{vae_forward.1} parent=0 // pred_check_branch
    %24 = sbr.rel (0) target = $region13
  $region12: #{vae_forward.1} parent=0 // pred_region
    _
  $region13: #{vae_forward.1} parent=0 // pred_fallthru
    _
  // Predicated region
  $region14: #{vae_forward.1} parent=0 // pred_check
    _
  $region15: #{vae_forward.1} parent=0 // pred_check_branch
    %26 = sbr.rel (0) target = $region17
  $region16: #{vae_forward.1} parent=0 // pred_region
    _
  $region17: #{vae_forward.1} parent=0 // pred_fallthru
    _
  // Predicated region
  $region18: #{vae_forward.1} parent=0 // pred_check
    _
  $region19: #{vae_forward.1} parent=0 // pred_check_branch
    %28 = sbr.rel (0) target = $region21
  $region20: #{vae_forward.1} parent=0 // pred_region
    _
  $region21: #{vae_forward.1} parent=0 // pred_fallthru
    _
  // Predicated region
  $region22: #{vae_forward.1} parent=0 // pred_check
    _
  $region23: #{vae_forward.1} parent=0 // pred_check_branch
    %30 = sbr.rel (0) target = $region25
  $region24: #{vae_forward.1} parent=0 // pred_region
    _
  $region25: #{vae_forward.1} parent=0 // pred_fallthru
    _
  // Predicated region
  $region26: #{vae_forward.1} parent=0 // pred_check
    _
  $region27: #{vae_forward.1} parent=0 // pred_check_branch
    %32 = sbr.rel (0) target = $region29
  $region28: #{vae_forward.1} parent=0 // pred_region
    _
  $region29: #{vae_forward.1} parent=0 // pred_fallthru
    _
  // Predicated region
  $region30: #{vae_forward.1} parent=0 // pred_check
    _
  $region31: #{vae_forward.1} parent=0 // pred_check_branch
    %34 = sbr.rel (0) target = $region33
  $region32: #{vae_forward.1} parent=0 // pred_region
    _
  $region33: #{vae_forward.1} parent=0 // pred_fallthru
    _
  // Predicated region
  $region34: #{vae_forward.1} parent=0 // pred_check
    _
  $region35: #{vae_forward.1} parent=0 // pred_check_branch
    %36 = sbr.rel (0) target = $region37
  $region36: #{vae_forward.1} parent=0 // pred_region
    _
  $region37: #{vae_forward.1} parent=0 // pred_fallthru
    _
  // Predicated region
  $region38: #{vae_forward.1} parent=0 // pred_check
    _
  $region39: #{vae_forward.1} parent=0 // pred_check_branch
    %38 = sbr.rel (0) target = $region41
  $region40: #{vae_forward.1} parent=0 // pred_region
    _
  $region41: #{vae_forward.1} parent=0 // pred_fallthru
    _
  // Predicated region
  $region42: #{vae_forward.1} parent=0 // pred_check
    _
  $region43: #{vae_forward.1} parent=0 // pred_check_branch
    %40 = sbr.rel (0) target = $region45
  $region44: #{vae_forward.1} parent=0 // pred_region
    _
  $region45: #{vae_forward.1} parent=0 // pred_fallthru
    _
  // Predicated region
  $region46: #{vae_forward.1} parent=0 // pred_check
    _
  $region47: #{vae_forward.1} parent=0 // pred_check_branch
    %42 = sbr.rel (0) target = $region49
  $region48: #{vae_forward.1} parent=0 // pred_region
    _
  $region49: #{vae_forward.1} parent=0 // pred_fallthru
    _
  // Predicated region
  $region50: #{vae_forward.1} parent=0 // pred_check
    _
  $region51: #{vae_forward.1} parent=0 // pred_check_branch
    %44 = sbr.rel (0) target = $region53
  $region52: #{vae_forward.1} parent=0 // pred_region
    _
  $region53: #{vae_forward.1} parent=0 // pred_fallthru
    _
  // Predicated region
  $region54: #{vae_forward.1} parent=0 // pred_check
    _
  $region55: #{vae_forward.1} parent=0 // pred_check_branch
    %46 = sbr.rel (0) target = $region57
  $region56: #{vae_forward.1} parent=0 // pred_region
    _
  $region57: #{vae_forward.1} parent=0 // pred_fallthru
    _
  %v48 = vld [vmem:[%s0] sm:$0xff]
  %v49 = vpack.c.bf16 %v48, %v48
  %v50 = vld [vmem:[%s2] sm:$0xf]
  %v51 = vld [vmem:[%s2 + $0x4] sm:$0xf]
  %v52 = vld [vmem:[%s2 + $0x8] sm:$0xf]
  %v53 = vld [vmem:[%s2 + $0xc] sm:$0xf]
  %v54 = vld [vmem:[%s3] sm:$0x1]
  %v56 = vperm.slane %v54, 0
  %v62 = vunpack.c.l.b16 %v50
  %v63 = vunpack.c.l.b16 %v51
  %v64 = vunpack.c.l.b16 %v52
  %v65 = vunpack.c.l.b16 %v53
  %v66 = vpack.c.b16 %v63, %v62
  %v67 = vpack.c.b16 %v65, %v64
  %vm70 = vcmask 261120
  %v72 = vsel %vm70, %v49, 0
  %74 = vmatpush.bf16.msra.mxu0 0
  %75 = vmatpush.bf16.msra.mxu0 0
  %76 = vmatpush.bf16.msra.mxu0 0
  %77 = vmatpush.bf16.msra.mxu0 0
  %78 = vmatpush.bf16.msra.mxu0 0
  %79 = vmatpush.bf16.msra.mxu0 0
  %80 = vmatpush.bf16.msra.mxu0 %v67
  %81 = vmatpush.bf16.msra.mxu0 %v66
  %82 = vmatmul.bf16.gmra.mxu0 %v72
  %v83 = vpop.f32.mrf.mxu0
  %v84 = vadd.f32 %v56, %v83
  %v85 = vpop.f32.mrf.mxu0
  %86 = vdwg.mxu0
  %v87 = vmax.f32 %v84, 0.0
  %v88 = vpack.c.bf16 %v87, %v87
  %v89 = vld [vmem:[%s4] sm:$0xf]
  %v90 = vld [vmem:[%s4 + $0x4] sm:$0xf]
  %v91 = vld [vmem:[%s4 + $0x8] sm:$0xf]
  %v92 = vld [vmem:[%s4 + $0xc] sm:$0xf]
  %v93 = vld [vmem:[%s4 + $0x10] sm:$0xf]
  %v94 = vld [vmem:[%s4 + $0x14] sm:$0xf]
  %v95 = vld [vmem:[%s4 + $0x18] sm:$0xf]
  %v96 = vld [vmem:[%s4 + $0x1c] sm:$0xf]
  %v97 = vld [vmem:[%s4 + $0x20] sm:$0xf]
  %v98 = vld [vmem:[%s4 + $0x24] sm:$0xf]
  %v99 = vld [vmem:[%s4 + $0x28] sm:$0xf]
  %v100 = vld [vmem:[%s4 + $0x2c] sm:$0xf]
  %v101 = vld [vmem:[%s4 + $0x30] sm:$0xf]
  %v102 = vld [vmem:[%s4 + $0x34] sm:$0xf]
  %v103 = vld [vmem:[%s4 + $0x38] sm:$0xf]
  %v104 = vld [vmem:[%s4 + $0x3c] sm:$0xf]
  %v105 = vld [vmem:[%s5] sm:$0x1]
  %v107 = vperm.slane %v105, 0
  %v125 = vunpack.c.l.b16 %v89
  %v126 = vunpack.c.l.b16 %v90
  %v127 = vunpack.c.l.b16 %v91
  %v128 = vunpack.c.l.b16 %v92
  %v129 = vunpack.c.l.b16 %v93
  %v130 = vunpack.c.l.b16 %v94
  %v131 = vunpack.c.l.b16 %v95
  %v132 = vunpack.c.l.b16 %v96
  %v133 = vunpack.c.l.b16 %v97
  %v134 = vunpack.c.l.b16 %v98
  %v135 = vunpack.c.l.b16 %v99
  %v136 = vunpack.c.l.b16 %v100
  %v137 = vunpack.c.l.b16 %v101
  %v138 = vunpack.c.l.b16 %v102
  %v139 = vunpack.c.l.b16 %v103
  %v140 = vunpack.c.l.b16 %v104
  %v141 = vpack.c.b16 %v126, %v125
  %v142 = vpack.c.b16 %v128, %v127
  %v143 = vpack.c.b16 %v130, %v129
  %v144 = vpack.c.b16 %v132, %v131
  %v145 = vpack.c.b16 %v134, %v133
  %v146 = vpack.c.b16 %v136, %v135
  %v147 = vpack.c.b16 %v138, %v137
  %v148 = vpack.c.b16 %v140, %v139
  %157 = vmatpush.bf16.msra.mxu0 %v148
  %158 = vmatpush.bf16.msra.mxu0 %v147
  %159 = vmatpush.bf16.msra.mxu0 %v146
  %160 = vmatpush.bf16.msra.mxu0 %v145
  %161 = vmatpush.bf16.msra.mxu0 %v144
  %162 = vmatpush.bf16.msra.mxu0 %v143
  %163 = vmatpush.bf16.msra.mxu0 %v142
  %164 = vmatpush.bf16.msra.mxu0 %v141
  %165 = vmatmul.bf16.gmra.mxu0 %v88
  %v166 = vpop.f32.mrf.mxu0
  %v167 = vadd.f32 %v107, %v166
  %v168 = vpop.f32.mrf.mxu0
  %169 = vdwg.mxu0
  %v170 = vmax.f32 %v167, 0.0
  %v171 = vpack.c.bf16 %v170, %v170
  %v172 = vld [vmem:[%s6] sm:$0xf]
  %v173 = vld [vmem:[%s6 + $0x4] sm:$0xf]
  %v174 = vld [vmem:[%s6 + $0x8] sm:$0xf]
  %v175 = vld [vmem:[%s6 + $0xc] sm:$0xf]
  %v176 = vld [vmem:[%s6 + $0x10] sm:$0xf]
  %v177 = vld [vmem:[%s6 + $0x14] sm:$0xf]
  %v178 = vld [vmem:[%s6 + $0x18] sm:$0xf]
  %v179 = vld [vmem:[%s6 + $0x1c] sm:$0xf]
  %v180 = vld [vmem:[%s7] sm:$0x1]
  %v182 = vperm.slane %v180, 0
  %v192 = vunpack.c.l.b16 %v172
  %v193 = vunpack.c.l.b16 %v173
  %v194 = vunpack.c.l.b16 %v174
  %v195 = vunpack.c.l.b16 %v175
  %v196 = vunpack.c.l.b16 %v176
  %v197 = vunpack.c.l.b16 %v177
  %v198 = vunpack.c.l.b16 %v178
  %v199 = vunpack.c.l.b16 %v179
  %v200 = vpack.c.b16 %v193, %v192
  %v201 = vpack.c.b16 %v195, %v194
  %v202 = vpack.c.b16 %v197, %v196
  %v203 = vpack.c.b16 %v199, %v198
  %vm208 = vcmask 523264
  %v210 = vsel %vm208, %v171, 0
  %212 = vmatpush.bf16.msra.mxu0 0
  %213 = vmatpush.bf16.msra.mxu0 0
  %214 = vmatpush.bf16.msra.mxu0 0
  %215 = vmatpush.bf16.msra.mxu0 0
  %216 = vmatpush.bf16.msra.mxu0 %v203
  %217 = vmatpush.bf16.msra.mxu0 %v202
  %218 = vmatpush.bf16.msra.mxu0 %v201
  %219 = vmatpush.bf16.msra.mxu0 %v200
  %220 = vmatmul.bf16.gmra.mxu0 %v210
  %v221 = vpop.f32.mrf.mxu0
  %v222 = vadd.f32 %v182, %v221
  %v223 = vpop.f32.mrf.mxu0
  %224 = vdwg.mxu0
  %v225 = vmul.f32 %v222, 0.5
  %v226 = vmul.f32 %v225, 1.442695
  %v227 = vpow.pop %v226
  %v228 = vld [vmem:[%s1] sm:$0xff]
  %230 = vrot.lane.b32.xlu0 %v227, 120
  %v231 = vpop.permute.xlu0 %230
  %v233 = vmul.f32 %v228, %v231
  %v234 = vadd.f32 %v222, %v233
  %v235 = vpack.c.bf16 %v234, %v234
  %v236 = vld [vmem:[%s8] sm:$0xf]
  %v237 = vld [vmem:[%s9] sm:$0x1]
  %v239 = vperm.slane %v237, 0
  %vm241 = vcmask 64512
  %v243 = vsel %vm241, %v235, 0
  %vm245 = vcmask 1043456
  %v247 = vsel %vm245, %v236, 0
  %249 = vmatpush.bf16.msra.mxu0 0
  %250 = vmatpush.bf16.msra.mxu0 0
  %251 = vmatpush.bf16.msra.mxu0 0
  %252 = vmatpush.bf16.msra.mxu0 0
  %253 = vmatpush.bf16.msra.mxu0 0
  %254 = vmatpush.bf16.msra.mxu0 0
  %255 = vmatpush.bf16.msra.mxu0 0
  %256 = vmatpush.bf16.msra.mxu0 %v247
  %257 = vmatmul.bf16.gmra.mxu0 %v243
  %v258 = vpop.f32.mrf.mxu0
  %v259 = vadd.f32 %v239, %v258
  %v260 = vpop.f32.mrf.mxu0
  %261 = vdwg.mxu0
  %v262 = vmax.f32 %v259, 0.0
  %v263 = vpack.c.bf16 %v262, %v262
  %v264 = vld [vmem:[%s10] sm:$0xf]
  %v265 = vld [vmem:[%s10 + $0x4] sm:$0xf]
  %v266 = vld [vmem:[%s10 + $0x8] sm:$0xf]
  %v267 = vld [vmem:[%s10 + $0xc] sm:$0xf]
  %v268 = vld [vmem:[%s10 + $0x10] sm:$0xf]
  %v269 = vld [vmem:[%s10 + $0x14] sm:$0xf]
  %v270 = vld [vmem:[%s10 + $0x18] sm:$0xf]
  %v271 = vld [vmem:[%s10 + $0x1c] sm:$0xf]
  %v272 = vld [vmem:[%s11] sm:$0x1]
  %v274 = vperm.slane %v272, 0
  %v284 = vunpack.c.l.b16 %v264
  %v285 = vunpack.c.l.b16 %v265
  %v286 = vunpack.c.l.b16 %v266
  %v287 = vunpack.c.l.b16 %v267
  %v288 = vunpack.c.l.b16 %v268
  %v289 = vunpack.c.l.b16 %v269
  %v290 = vunpack.c.l.b16 %v270
  %v291 = vunpack.c.l.b16 %v271
  %v292 = vpack.c.b16 %v285, %v284
  %v293 = vpack.c.b16 %v287, %v286
  %v294 = vpack.c.b16 %v289, %v288
  %v295 = vpack.c.b16 %v291, %v290
  %v301 = vsel %vm208, %v263, 0
  %303 = vmatpush.bf16.msra.mxu0 0
  %304 = vmatpush.bf16.msra.mxu0 0
  %305 = vmatpush.bf16.msra.mxu0 0
  %306 = vmatpush.bf16.msra.mxu0 0
  %307 = vmatpush.bf16.msra.mxu0 %v295
  %308 = vmatpush.bf16.msra.mxu0 %v294
  %309 = vmatpush.bf16.msra.mxu0 %v293
  %310 = vmatpush.bf16.msra.mxu0 %v292
  %311 = vmatmul.bf16.gmra.mxu0 %v301
  %v312 = vpop.f32.mrf.mxu0
  %v313 = vadd.f32 %v274, %v312
  %v314 = vpop.f32.mrf.mxu0
  %315 = vdwg.mxu0
  %v316 = vmax.f32 %v313, 0.0
  %v317 = vpack.c.bf16 %v316, %v316
  %v318 = vld [vmem:[%s12] sm:$0xf]
  %v319 = vld [vmem:[%s12 + $0x4] sm:$0xf]
  %v320 = vld [vmem:[%s12 + $0x8] sm:$0xf]
  %v321 = vld [vmem:[%s12 + $0xc] sm:$0xf]
  %v322 = vld [vmem:[%s12 + $0x10] sm:$0xf]
  %v323 = vld [vmem:[%s12 + $0x14] sm:$0xf]
  %v324 = vld [vmem:[%s12 + $0x18] sm:$0xf]
  %v325 = vld [vmem:[%s12 + $0x1c] sm:$0xf]
  %v326 = vld [vmem:[%s12 + $0x20] sm:$0xf]
  %v327 = vld [vmem:[%s12 + $0x24] sm:$0xf]
  %v328 = vld [vmem:[%s12 + $0x28] sm:$0xf]
  %v329 = vld [vmem:[%s12 + $0x2c] sm:$0xf]
  %v330 = vld [vmem:[%s12 + $0x30] sm:$0xf]
  %v331 = vld [vmem:[%s12 + $0x34] sm:$0xf]
  %v332 = vld [vmem:[%s12 + $0x38] sm:$0xf]
  %v333 = vld [vmem:[%s12 + $0x3c] sm:$0xf]
  %v334 = vld [vmem:[%s13] sm:$0x1]
  %v336 = vperm.slane %v334, 0
  %v354 = vunpack.c.l.b16 %v318
  %v355 = vunpack.c.l.b16 %v319
  %v356 = vunpack.c.l.b16 %v320
  %v357 = vunpack.c.l.b16 %v321
  %v358 = vunpack.c.l.b16 %v322
  %v359 = vunpack.c.l.b16 %v323
  %v360 = vunpack.c.l.b16 %v324
  %v361 = vunpack.c.l.b16 %v325
  %v362 = vunpack.c.l.b16 %v326
  %v363 = vunpack.c.l.b16 %v327
  %v364 = vunpack.c.l.b16 %v328
  %v365 = vunpack.c.l.b16 %v329
  %v366 = vunpack.c.l.b16 %v330
  %v367 = vunpack.c.l.b16 %v331
  %v368 = vunpack.c.l.b16 %v332
  %v369 = vunpack.c.l.b16 %v333
  %v370 = vpack.c.b16 %v355, %v354
  %v371 = vpack.c.b16 %v357, %v356
  %v372 = vpack.c.b16 %v359, %v358
  %v373 = vpack.c.b16 %v361, %v360
  %v374 = vpack.c.b16 %v363, %v362
  %v375 = vpack.c.b16 %v365, %v364
  %v376 = vpack.c.b16 %v367, %v366
  %v377 = vpack.c.b16 %v369, %v368
  %386 = vmatpush.bf16.msra.mxu0 %v377
  %387 = vmatpush.bf16.msra.mxu0 %v376
  %388 = vmatpush.bf16.msra.mxu0 %v375
  %389 = vmatpush.bf16.msra.mxu0 %v374
  %390 = vmatpush.bf16.msra.mxu0 %v373
  %391 = vmatpush.bf16.msra.mxu0 %v372
  %392 = vmatpush.bf16.msra.mxu0 %v371
  %393 = vmatpush.bf16.msra.mxu0 %v370
  %394 = vmatmul.bf16.gmra.mxu0 %v317
  %v395 = vpop.f32.mrf.mxu0
  %v396 = vadd.f32 %v336, %v395
  %v397 = vpop.f32.mrf.mxu0
  %398 = vdwg.mxu0
  %v399 = vxor.u32 %v396, 2147483648
  %v400 = vmul.f32 %v399, 1.442695
  %v401 = vpow.pop %v400
  %v402 = vadd.f32 %v401, 1.0
  %v403 = vrcp.pop %v402
  %v404 = vmul.f32 %v402, %v403
  %v405 = vsub.f32 1.0, %v404
  %v406 = vmul.f32 %v403, %v405
  %v407 = vadd.f32 %v403, %v406
  %vm408 = vweird.f32 %v402
  %vm409 = vweird.f32 %v403
  %vm410 = vmor %vm408, %vm409
  %v411 = vsel %vm410, %v403, %v407
  %v412 = vand.u32 2147483647, %v402
  %vm413 = vcmp.eq.f32.partialorder %v412, 8.507059e+37
  %v414 = vand.u32 %v402, 2147483648
  %v415 = vor.u32 1.1754944e-38, %v414
  %v416 = vsel %vm413, %v415, %v411
  %v417 = vmul.f32 1.0, %v416
  %419 = vrot.lane.b32.xlu0 %v222, 32
  %v420 = vpop.permute.xlu0 %419
  %v422 = vsel %vm70, %v417, %v420
  %vm423 = vcmask 392192
  %424 = vst.msk [vmem:[%s14] sm:$0xff] %vm423, %v422
  // Predicated region
  $region58: #{vae_forward.1} parent=0 // pred_check
    _
  $region59: #{vae_forward.1} parent=0 // pred_check_branch
    %426 = sbr.rel (0) target = $region61
  $region60: #{vae_forward.1} parent=0 // pred_region
    _
  $region61: #{vae_forward.1} parent=0 // pred_fallthru
    _
  // Predicated region
  $region62: #{vae_forward.1} parent=0 // pred_check
    _
  $region63: #{vae_forward.1} parent=0 // pred_check_branch
    %428 = sbr.rel (0) target = $region65
  $region64: #{vae_forward.1} parent=0 // pred_region
    _
  $region65: #{vae_forward.1} parent=0 // pred_fallthru
    _

</llo_original>
